<compile_context>
chip_gen: v7x
topology: tpu7x:2x2x1
jax: 0.10.0
libtpu: 0.0.40
codegen_flags: <defaults>
</compile_context>

<pallas_src>
import functools

import jax
import jax.numpy as jnp
from jax.experimental import pallas as pl
from jax.experimental.pallas import tpu as pltpu


def _round_up(n, m):
    return ((n + m - 1) // m) * m


def _device_kind():
    try:
        return jax.devices()[0].device_kind.lower()
    except Exception:
        return ""


def _has_bf16_vpu():
    # bf16 VPU/EUP exists on v6e (Trillium) and v7x; not on v5e and older.
    kind = _device_kind()
    return ("v6" in kind) or ("v7" in kind) or ("trillium" in kind)


def _is_v7x():
    return "v7" in _device_kind()


def _choose_tile(b_pad, block_b, prefer_multi_step):
    """Largest lane-dense tile (multiple of 128) that divides b_pad and is
    <= block_b; if prefer_multi_step (v7x megacore), keep >= 2 grid steps."""
    m = b_pad // 128                      # b_pad is a multiple of 128
    cap = max(1, min(block_b // 128, m))
    if prefer_multi_step and m >= 2:
        cap = max(1, min(cap, m // 2))    # leave work for the second TensorCore
    best = 1
    for d in range(1, cap + 1):
        if m % d == 0:
            best = d
    return best * 128


def _netd_kernel(x_ref, w1_ref, b1_ref, w2_ref, b2_ref, w3_ref, b3_ref, o_ref,
                 *, compute_dtype):
    # x_ref: (2, TB); weights in PyTorch layout (out, in); biases (out, 1);
    # w3 passed as a (1, ndf) row; o_ref: (1, TB). Batch lives on the lane axis.
    cdt = compute_dtype

    x = x_ref[...].astype(cdt)                      # (2, TB)
    w1 = w1_ref[...].astype(cdt)                    # (ndf, 2)
    w2 = w2_ref[...].astype(cdt)                    # (ndf, ndf)
    w3 = w3_ref[...].astype(cdt)                    # (1, ndf)

    # ---- Layer 1: Linear(2, ndf) on the MXU (K=2), f32 accumulate, + bias.
    h1 = jnp.dot(w1, x, preferred_element_type=jnp.float32) + b1_ref[...]
    h1 = jnp.tanh(h1.astype(cdt))                   # EUP; bf16 halves vregs on v6e/v7x

    # ---- Layer 2: Linear(ndf, ndf) on the MXU.
    h2 = jnp.dot(w2, h1, preferred_element_type=jnp.float32) + b2_ref[...]
    h2 = jnp.tanh(h2.astype(cdt))                   # (ndf, TB)

    # ---- Layer 3: Linear(ndf, 1) on the MXU: (1, ndf) x (ndf, TB) -> (1, TB).
    h3 = jnp.dot(w3, h2, preferred_element_type=jnp.float32) + b3_ref[...]

    # ---- Sigmoid via tanh identity: stable, one EUP op + one FMA (f32).
    o_ref[...] = 0.5 * jnp.tanh(0.5 * h3) + 0.5


def netd_forward(x, params, *, block_b=8192, use_bf16=None):
    """x: (B, 2) float32. params: PyTorch-layout weights W:(out,in), b:(out,1).

    Returns sigmoid scores of shape (B, 1), matching `_netD.forward`.
    """
    B = x.shape[0]
    w1, b1 = params["W1"], params["b1"]          # (ndf, 2),   (ndf, 1)
    w2, b2 = params["W2"], params["b2"]          # (ndf, ndf), (ndf, 1)
    w3, b3 = params["W3"], params["b3"]          # (1, ndf),   (1, 1)
    ndf = w1.shape[0]

    if use_bf16 is None:
        use_bf16 = _has_bf16_vpu()               # bf16 EUP/VPU/MXU on v6e/v7x only
    compute_dtype = jnp.bfloat16 if use_bf16 else jnp.float32

    # Pad batch only up to a lane multiple (128), not up to the tile size.
    b_pad = _round_up(B, 128)
    tb = _choose_tile(b_pad, max(128, _round_up(block_b, 128)),
                      prefer_multi_step=_is_v7x())
    n_steps = b_pad // tb

    # Feature-major: batch on the lane axis; tail-only pad (no full zero-init).
    # NOTE: producing/keeping x feature-major (2, B) upstream in the training
    # loop would remove this transpose pass entirely.
    xt = x.T                                      # (2, B)
    if b_pad != B:
        xt = jnp.pad(xt, ((0, 0), (0, b_pad - B)))

    w3_row = w3.reshape(1, ndf)                   # (1, ndf) row for the MXU dot

    pinned = lambda shape: pl.BlockSpec(shape, lambda i: (0, 0))  # VMEM-resident

    out = pl.pallas_call(
        functools.partial(_netd_kernel, compute_dtype=compute_dtype),
        out_shape=jax.ShapeDtypeStruct((1, b_pad), jnp.float32),
        grid=(n_steps,),
        in_specs=[
            pl.BlockSpec((2, tb), lambda i: (0, i)),   # x tile, streamed per step
            pinned(w1.shape), pinned(b1.shape),
            pinned(w2.shape), pinned(b2.shape),
            pinned(w3_row.shape), pinned(b3.shape),
        ],
        out_specs=pl.BlockSpec((1, tb), lambda i: (0, i)),
        compiler_params=pltpu.CompilerParams(
            dimension_semantics=("parallel",),          # megacore split on v7x
            vmem_limit_bytes=32 * 1024 * 1024,          # safe on v5e/v6e/v7x
        ),
    )(xt, w1, b1, w2, b2, w3_row, b3)

    # PyTorch: output.view(-1, 1)
    return out[0, :B].reshape(-1, 1)


def init_params(key, ndf):
    """PyTorch-style Linear init (uniform +/-1/sqrt(fan_in)); PyTorch layout:
    W is (out_features, in_features), b is (out_features, 1)."""
    ks = jax.random.split(key, 6)

    def lin(kw, kb, fan_in, fan_out):
        bound = 1.0 / jnp.sqrt(jnp.float32(fan_in))
        W = jax.random.uniform(kw, (fan_out, fan_in), jnp.float32, -bound, bound)
        b = jax.random.uniform(kb, (fan_out, 1), jnp.float32, -bound, bound)
        return W, b

    W1, b1 = lin(ks[0], ks[1], 2, ndf)
    W2, b2 = lin(ks[2], ks[3], ndf, ndf)
    W3, b3 = lin(ks[4], ks[5], ndf, 1)
    return {"W1": W1, "b1": b1, "W2": W2, "b2": b2, "W3": W3, "b3": b3}


def netd_reference(x, params):
    h = jnp.tanh(x @ params["W1"].T + params["b1"].T)
    h = jnp.tanh(h @ params["W2"].T + params["b2"].T)
    return jax.nn.sigmoid(h @ params["W3"].T + params["b3"].T).reshape(-1, 1)


if __name__ == "__main__":
    key = jax.random.PRNGKey(0)
    k_x, k_p, k_x2 = jax.random.split(key, 3)

    ndf = 32
    params = init_params(k_p, ndf)

    # Small demo batch (2-D toy-GAN points), single grid step, f32 path
    # checked at tight tolerance (validates the kernel math itself).
    x_small = jax.random.normal(k_x, (8, 2), dtype=jnp.float32)
    out_small = jax.block_until_ready(
        netd_forward(x_small, params, use_bf16=False))
    assert out_small.shape == (8, 1)
    ref_small = netd_reference(x_small, params)
    assert bool(jnp.allclose(out_small, ref_small, atol=2e-3, rtol=2e-3)), (
        float(jnp.max(jnp.abs(out_small - ref_small))))

    # Larger ragged batch: multi-step grid + tail-padding path, auto precision
    # (bf16 activations on v6e/v7x, f32 on v5e).
    x_big = jax.random.normal(k_x2, (1000, 2), dtype=jnp.float32) * 3.0
    auto_bf16 = _has_bf16_vpu()
    out_big = jax.block_until_ready(netd_forward(x_big, params, block_b=512))
    assert out_big.shape == (1000, 1)
    ref_big = netd_reference(x_big, params)
    tol = 2e-2 if auto_bf16 else 2e-3
    assert bool(jnp.allclose(out_big, ref_big, atol=tol, rtol=tol)), (
        float(jnp.max(jnp.abs(out_big - ref_big))))
    assert bool(jnp.all((out_big >= 0.0) & (out_big <= 1.0)))
    assert bool(jnp.all(jnp.isfinite(out_big)))

    # Explicitly exercise the bf16 fast path (works, if slower, on v5e too).
    out_bf16 = jax.block_until_ready(
        netd_forward(x_big, params, use_bf16=True))
    assert bool(jnp.allclose(out_bf16, ref_big, atol=2e-2, rtol=2e-2)), (
        float(jnp.max(jnp.abs(out_bf16 - ref_big))))

    print("KERNEL_OK")
</pallas_src>

<mosaic_0001>
module attributes {stable_mosaic.version = 11 : i64} {
  func.func @_netd_kernel(%arg0: i32, %arg1: memref<2x128xf32, #tpu.memory_space<vmem>>, %arg2: memref<32x2xf32, #tpu.memory_space<vmem>>, %arg3: memref<32x1xf32, #tpu.memory_space<vmem>>, %arg4: memref<32x32xf32, #tpu.memory_space<vmem>>, %arg5: memref<32x1xf32, #tpu.memory_space<vmem>>, %arg6: memref<1x32xf32, #tpu.memory_space<vmem>>, %arg7: memref<1x1xf32, #tpu.memory_space<vmem>>, %arg8: memref<1x128xf32, #tpu.memory_space<vmem>>) attributes {dimension_semantics = [#tpu.dimension_semantics<parallel>], iteration_bounds = array<i64: 1>, scalar_prefetch = 0 : i64, scratch_operands = 0 : i64, tpu.core_type = #tpu.core_type<tc>, window_params = [{transform_indices = @transform_0, window_bounds = array<i64: 2, 128>}, {pipeline_mode = #tpu.pipeline_mode<synchronous>, transform_indices = @transform_1, window_bounds = array<i64: 32, 2>}, {pipeline_mode = #tpu.pipeline_mode<synchronous>, transform_indices = @transform_2, window_bounds = array<i64: 32, 1>}, {pipeline_mode = #tpu.pipeline_mode<synchronous>, transform_indices = @transform_3, window_bounds = array<i64: 32, 32>}, {pipeline_mode = #tpu.pipeline_mode<synchronous>, transform_indices = @transform_4, window_bounds = array<i64: 32, 1>}, {pipeline_mode = #tpu.pipeline_mode<synchronous>, transform_indices = @transform_5, window_bounds = array<i64: 1, 32>}, {pipeline_mode = #tpu.pipeline_mode<synchronous>, transform_indices = @transform_6, window_bounds = array<i64: 1, 1>}, {transform_indices = @transform_7, window_bounds = array<i64: 1, 128>}]} {
    %c0 = arith.constant 0 : index
    %c0_0 = arith.constant 0 : index
    %0 = vector.load %arg1[%c0, %c0_0] : memref<2x128xf32, #tpu.memory_space<vmem>>, vector<2x128xf32>
    %c0_1 = arith.constant 0 : index
    %c0_2 = arith.constant 0 : index
    %1 = vector.load %arg2[%c0_1, %c0_2] : memref<32x2xf32, #tpu.memory_space<vmem>>, vector<32x2xf32>
    %c0_3 = arith.constant 0 : index
    %c0_4 = arith.constant 0 : index
    %2 = vector.load %arg4[%c0_3, %c0_4] : memref<32x32xf32, #tpu.memory_space<vmem>>, vector<32x32xf32>
    %c0_5 = arith.constant 0 : index
    %c0_6 = arith.constant 0 : index
    %3 = vector.load %arg6[%c0_5, %c0_6] : memref<1x32xf32, #tpu.memory_space<vmem>>, vector<1x32xf32>
    %cst = arith.constant dense<0.000000e+00> : vector<32x128xf32>
    %4 = tpu.matmul %1, %0, %cst {dimension_numbers = #tpu.dot_dimension_numbers<[1], [0], [0], [1], [0, 0, 1, 1], [], []>} : vector<32x2xf32>, vector<2x128xf32>, vector<32x128xf32> -> vector<32x128xf32>
    %c0_7 = arith.constant 0 : index
    %c0_8 = arith.constant 0 : index
    %5 = vector.load %arg3[%c0_7, %c0_8] : memref<32x1xf32, #tpu.memory_space<vmem>>, vector<32x1xf32>
    %6 = vector.broadcast %5 : vector<32x1xf32> to vector<32x128xf32>
    %7 = arith.addf %4, %6 : vector<32x128xf32>
    %8 = math.tanh %7 : vector<32x128xf32>
    %cst_9 = arith.constant dense<0.000000e+00> : vector<32x128xf32>
    %9 = tpu.matmul %2, %8, %cst_9 {dimension_numbers = #tpu.dot_dimension_numbers<[1], [0], [0], [1], [0, 0, 1, 1], [], []>} : vector<32x32xf32>, vector<32x128xf32>, vector<32x128xf32> -> vector<32x128xf32>
    %c0_10 = arith.constant 0 : index
    %c0_11 = arith.constant 0 : index
    %10 = vector.load %arg5[%c0_10, %c0_11] : memref<32x1xf32, #tpu.memory_space<vmem>>, vector<32x1xf32>
    %11 = vector.broadcast %10 : vector<32x1xf32> to vector<32x128xf32>
    %12 = arith.addf %9, %11 : vector<32x128xf32>
    %13 = math.tanh %12 : vector<32x128xf32>
    %cst_12 = arith.constant dense<0.000000e+00> : vector<1x128xf32>
    %14 = tpu.matmul %3, %13, %cst_12 {dimension_numbers = #tpu.dot_dimension_numbers<[1], [0], [0], [1], [0, 0, 1, 1], [], []>} : vector<1x32xf32>, vector<32x128xf32>, vector<1x128xf32> -> vector<1x128xf32>
    %c0_13 = arith.constant 0 : index
    %c0_14 = arith.constant 0 : index
    %15 = vector.load %arg7[%c0_13, %c0_14] : memref<1x1xf32, #tpu.memory_space<vmem>>, vector<1x1xf32>
    %16 = vector.broadcast %15 : vector<1x1xf32> to vector<1x128xf32>
    %17 = arith.addf %14, %16 : vector<1x128xf32>
    %cst_15 = arith.constant 5.000000e-01 : f32
    %18 = vector.broadcast %cst_15 : f32 to vector<1x128xf32>
    %19 = arith.mulf %18, %17 : vector<1x128xf32>
    %20 = math.tanh %19 : vector<1x128xf32>
    %cst_16 = arith.constant 5.000000e-01 : f32
    %21 = vector.broadcast %cst_16 : f32 to vector<1x128xf32>
    %22 = arith.mulf %21, %20 : vector<1x128xf32>
    %cst_17 = arith.constant 5.000000e-01 : f32
    %23 = vector.broadcast %cst_17 : f32 to vector<1x128xf32>
    %24 = arith.addf %22, %23 : vector<1x128xf32>
    %c0_18 = arith.constant 0 : index
    %c0_19 = arith.constant 0 : index
    %25 = vector.load %arg8[%c0_18, %c0_19] : memref<1x128xf32, #tpu.memory_space<vmem>>, vector<1x128xf32>
    tpu.vector_store %arg8[%c0_18, %c0_19], %24 {strides = array<i32>} : memref<1x128xf32, #tpu.memory_space<vmem>>, vector<1x128xf32>,
    return
  }
  func.func @transform_0(%arg0: i32) -> (i32, i32) {
    %c0_i32 = arith.constant 0 : i32
    %c0_i32_0 = arith.constant 0 : i32
    return %c0_i32, %arg0 : i32, i32
  }
  func.func @transform_1(%arg0: i32) -> (i32, i32) {
    %c0_i32 = arith.constant 0 : i32
    %c0_i32_0 = arith.constant 0 : i32
    %c0_i32_1 = arith.constant 0 : i32
    return %c0_i32, %c0_i32_0 : i32, i32
  }
  func.func @transform_2(%arg0: i32) -> (i32, i32) {
    %c0_i32 = arith.constant 0 : i32
    %c0_i32_0 = arith.constant 0 : i32
    %c0_i32_1 = arith.constant 0 : i32
    return %c0_i32, %c0_i32_0 : i32, i32
  }
  func.func @transform_3(%arg0: i32) -> (i32, i32) {
    %c0_i32 = arith.constant 0 : i32
    %c0_i32_0 = arith.constant 0 : i32
    %c0_i32_1 = arith.constant 0 : i32
    return %c0_i32, %c0_i32_0 : i32, i32
  }
  func.func @transform_4(%arg0: i32) -> (i32, i32) {
    %c0_i32 = arith.constant 0 : i32
    %c0_i32_0 = arith.constant 0 : i32
    %c0_i32_1 = arith.constant 0 : i32
    return %c0_i32, %c0_i32_0 : i32, i32
  }
  func.func @transform_5(%arg0: i32) -> (i32, i32) {
    %c0_i32 = arith.constant 0 : i32
    %c0_i32_0 = arith.constant 0 : i32
    %c0_i32_1 = arith.constant 0 : i32
    return %c0_i32, %c0_i32_0 : i32, i32
  }
  func.func @transform_6(%arg0: i32) -> (i32, i32) {
    %c0_i32 = arith.constant 0 : i32
    %c0_i32_0 = arith.constant 0 : i32
    %c0_i32_1 = arith.constant 0 : i32
    return %c0_i32, %c0_i32_0 : i32, i32
  }
  func.func @transform_7(%arg0: i32) -> (i32, i32) {
    %c0_i32 = arith.constant 0 : i32
    %c0_i32_0 = arith.constant 0 : i32
    return %c0_i32, %arg0 : i32, i32
  }
}

</mosaic_0001>

<llo_original>
// kernel: tpu_custom_call.1
$region0: #{tpu_custom_call.1}
  #allocation0 [shape = 'u32[]', space=smem, size = 0x4, offset = 0x4, fixed_abs, tag = 'smem constant byte address 0x4 - core index']
  #allocation1 [shape = 'u32[144,128]{1,0:T(1,128)}', space=vmem, size = 0x12000, scoped, tag = 'internal scratch']
  #allocation2 [shape = 'f32[1,1]{1,0:T(1,128)S(1)}', space=vmem, size = 0x200, scoped, tag = 'scoped memory for tpu_custom_call.1']
  %s0 = inlined_call_operand.vmem [shape: f32[2,128], index: 0, kind: input, shape index: {}]
  %s1 = inlined_call_operand.vmem [shape: f32[32,2], index: 1, kind: input, shape index: {}]
  %s2 = inlined_call_operand.vmem [shape: f32[32,1], index: 2, kind: input, shape index: {}]
  %s3 = inlined_call_operand.vmem [shape: f32[32,32], index: 3, kind: input, shape index: {}]
  %s4 = inlined_call_operand.vmem [shape: f32[32,1], index: 4, kind: input, shape index: {}]
  %s5 = inlined_call_operand.vmem [shape: f32[1,32], index: 5, kind: input, shape index: {}]
  %s6 = inlined_call_operand.<no memory space> [shape: f32[1,1], index: 6, kind: input, shape index: {}]
  %s7 = inlined_call_operand.hbm [shape: f32[1,128], index: 7, kind: output, shape index: {}]
  %s8 = sld [smem:[#allocation0]]
  $region38: #{tpu_custom_call.1} parent=0
    _
  %s10 = ssub.s32 1, %s8
  %s11 = scalar_select 0, %s10, %s8
  %v12 = vstv %s6
  %13 = vst [vmem:[#allocation2] sm:$0x1] %v12
  $region1: #{tpu_custom_call.1} parent=0
    #allocation3 [shape = 'u8[512]{0}', space=vmem, size = 0x400, scoped, tag = 'output window, operand 0, single buffered']
    #allocation4 [shape = 's32[1]{0}', space=sflag, size = 0x4, scoped, tag = 'scoped memory for tpu_custom_call.1']
    %14 = vsyncpa [#allocation4], 0
    // Predicated region
    $region2: #{tpu_custom_call.1} parent=1 // pred_check
      _
    $region3: #{tpu_custom_call.1} parent=1 // pred_check_branch
      %16 = sbr.rel (0) target = $region5
    $region4: #{tpu_custom_call.1} parent=1 // pred_region
      _
    $region5: #{tpu_custom_call.1} parent=1 // pred_fallthru
      _
    // Predicated region
    $region6: #{tpu_custom_call.1} parent=1 // pred_check
      _
    $region7: #{tpu_custom_call.1} parent=1 // pred_check_branch
      %18 = sbr.rel (0) target = $region9
    $region8: #{tpu_custom_call.1} parent=1 // pred_region
      _
    $region9: #{tpu_custom_call.1} parent=1 // pred_fallthru
      _
    // Predicated region
    $region10: #{tpu_custom_call.1} parent=1 // pred_check
      _
    $region11: #{tpu_custom_call.1} parent=1 // pred_check_branch
      %20 = sbr.rel (0) target = $region13
    $region12: #{tpu_custom_call.1} parent=1 // pred_region
      _
    $region13: #{tpu_custom_call.1} parent=1 // pred_fallthru
      _
    // Predicated region
    $region14: #{tpu_custom_call.1} parent=1 // pred_check
      _
    $region15: #{tpu_custom_call.1} parent=1 // pred_check_branch
      %22 = sbr.rel (0) target = $region17
    $region16: #{tpu_custom_call.1} parent=1 // pred_region
      _
    $region17: #{tpu_custom_call.1} parent=1 // pred_fallthru
      _
    // Predicated region
    $region18: #{tpu_custom_call.1} parent=1 // pred_check
      _
    $region19: #{tpu_custom_call.1} parent=1 // pred_check_branch
      %24 = sbr.rel (0) target = $region21
    $region20: #{tpu_custom_call.1} parent=1 // pred_region
      _
    $region21: #{tpu_custom_call.1} parent=1 // pred_fallthru
      _
    // Predicated region
    $region22: #{tpu_custom_call.1} parent=1 // pred_check
      _
    $region23: #{tpu_custom_call.1} parent=1 // pred_check_branch
      %26 = sbr.rel (0) target = $region25
    $region24: #{tpu_custom_call.1} parent=1 // pred_region
      _
    $region25: #{tpu_custom_call.1} parent=1 // pred_fallthru
      _
    // Predicated region
    $region26: #{tpu_custom_call.1} parent=1 // pred_check
      _
    $region27: #{tpu_custom_call.1} parent=1 // pred_check_branch
      %28 = sbr.rel (0) target = $region29
    $region28: #{tpu_custom_call.1} parent=1 // pred_region
      _
    $region29: #{tpu_custom_call.1} parent=1 // pred_fallthru
      _
    %v29 = vld [vmem:[%s0] sm:$0x3]
    %v30 = vld [vmem:[%s1] sm:$0xff]
    %v31 = vld [vmem:[%s1 + $0x8] sm:$0xff]
    %v32 = vld [vmem:[%s1 + $0x10] sm:$0xff]
    %v33 = vld [vmem:[%s1 + $0x18] sm:$0xff]
    %v34 = vld [vmem:[%s3] sm:$0xff]
    %v35 = vld [vmem:[%s3 + $0x8] sm:$0xff]
    %v36 = vld [vmem:[%s3 + $0x10] sm:$0xff]
    %v37 = vld [vmem:[%s3 + $0x18] sm:$0xff]
    %v38 = vld [vmem:[%s5] sm:$0x1]
    %v39 = vld [vmem:[%s2] sm:$0xff]
    %v40 = vld [vmem:[%s2 + $0x8] sm:$0xff]
    %v41 = vld [vmem:[%s2 + $0x10] sm:$0xff]
    %v42 = vld [vmem:[%s2 + $0x18] sm:$0xff]
    %44 = vset.pattern.permute.xlu0 0
    %45 = vperm.xlu0 %44, %v39
    %v46 = vpop.permute.xlu0 %45
    %49 = vset.pattern.permute.xlu0 0
    %50 = vperm.xlu0 %49, %v40
    %v51 = vpop.permute.xlu0 %50
    %54 = vset.pattern.permute.xlu0 0
    %55 = vperm.xlu0 %54, %v41
    %v56 = vpop.permute.xlu0 %55
    %59 = vset.pattern.permute.xlu0 0
    %60 = vperm.xlu0 %59, %v42
    %v61 = vpop.permute.xlu0 %60
    %vm63 = vcmask 15360
    %v65 = vsel %vm63, %v30, 0
    %v68 = vsel %vm63, %v31, 0
    %v71 = vsel %vm63, %v32, 0
    %v74 = vsel %vm63, %v33, 0
    %vm76 = vcmask 1041408
    %v78 = vsel %vm76, %v29, 0
    %80 = vmatprep.subr.mxu0 0.0
    %81 = vmatpush1.msra.mxu0 %v78
    %82 = vmatprep.subr.mxu0 0.0
    %83 = vmatpush1.msra.mxu0 0.0
    %84 = vmatprep.subr.mxu0 0.0
    %85 = vmatpush1.msra.mxu0 0.0
    %86 = vmatprep.subr.mxu0 0.0
    %87 = vmatpush1.msra.mxu0 0.0
    %88 = vmatprep.subr.mxu0 0.0
    %89 = vmatpush1.msra.mxu0 0.0
    %90 = vmatprep.subr.mxu0 0.0
    %91 = vmatpush1.msra.mxu0 0.0
    %92 = vmatprep.subr.mxu0 0.0
    %93 = vmatpush1.msra.mxu0 0.0
    %94 = vmatprep.subr.mxu0 0.0
    %95 = vmatpush1.msra.mxu0 0.0
    %96 = vmatprep.subr.mxu0 0.0
    %97 = vmatpush1.msra.mxu0 0.0
    %98 = vmatprep.subr.mxu0 0.0
    %99 = vmatpush1.msra.mxu0 0.0
    %100 = vmatprep.subr.mxu0 0.0
    %101 = vmatpush1.msra.mxu0 0.0
    %102 = vmatprep.subr.mxu0 0.0
    %103 = vmatpush1.msra.mxu0 0.0
    %104 = vmatprep.subr.mxu0 0.0
    %105 = vmatpush1.msra.mxu0 0.0
    %106 = vmatprep.subr.mxu0 0.0
    %107 = vmatpush1.msra.mxu0 0.0
    %108 = vmatprep.subr.mxu0 0.0
    %109 = vmatpush1.msra.mxu0 0.0
    %110 = vmatprep.subr.mxu0 0.0
    %111 = vmatpush1.msra.mxu0 0.0
    %112 = vmatprep.subr.mxu0 0.0
    %113 = vmatpush1.msra.mxu0 0.0
    %114 = vmatprep.subr.mxu0 0.0
    %115 = vmatpush1.msra.mxu0 0.0
    %116 = vmatprep.subr.mxu0 0.0
    %117 = vmatpush1.msra.mxu0 0.0
    %118 = vmatprep.subr.mxu0 0.0
    %119 = vmatpush1.msra.mxu0 0.0
    %120 = vmatprep.subr.mxu0 0.0
    %121 = vmatpush1.msra.mxu0 0.0
    %122 = vmatprep.subr.mxu0 0.0
    %123 = vmatpush1.msra.mxu0 0.0
    %124 = vmatprep.subr.mxu0 0.0
    %125 = vmatpush1.msra.mxu0 0.0
    %126 = vmatprep.subr.mxu0 0.0
    %127 = vmatpush1.msra.mxu0 0.0
    %128 = vmatprep.subr.mxu0 0.0
    %129 = vmatpush1.msra.mxu0 0.0
    %130 = vmatprep.subr.mxu0 0.0
    %131 = vmatpush1.msra.mxu0 0.0
    %132 = vmatprep.subr.mxu0 0.0
    %133 = vmatpush1.msra.mxu0 0.0
    %134 = vmatprep.subr.mxu0 0.0
    %135 = vmatpush1.msra.mxu0 0.0
    %136 = vmatprep.subr.mxu0 0.0
    %137 = vmatpush1.msra.mxu0 0.0
    %138 = vmatprep.subr.mxu0 0.0
    %139 = vmatpush1.msra.mxu0 0.0
    %140 = vmatprep.subr.mxu0 0.0
    %141 = vmatpush1.msra.mxu0 0.0
    %142 = vmatprep.subr.mxu0 0.0
    %143 = vmatpush1.msra.mxu0 0.0
    %144 = vmatprep.mubr.f32.mxu0 0.0
    %145 = vmatmul.mubr.f32.gmra.mrb[0].mxu0 %v65
    %v146 = vpop.f32.mrb[0].mxu0
    %v147 = vadd.f32 %v46, %v146
    %v148 = vpop.f32.mrb[0].mxu0
    %149 = vmatprep.mubr.f32.mxu0 0.0
    %150 = vmatmul.mubr.f32.gmra.mrb[0].mxu0 %v68
    %v151 = vpop.f32.mrb[0].mxu0
    %v152 = vadd.f32 %v51, %v151
    %v153 = vpop.f32.mrb[0].mxu0
    %154 = vmatprep.mubr.f32.mxu0 0.0
    %155 = vmatmul.mubr.f32.gmra.mrb[0].mxu0 %v71
    %v156 = vpop.f32.mrb[0].mxu0
    %v157 = vadd.f32 %v56, %v156
    %v158 = vpop.f32.mrb[0].mxu0
    %159 = vmatprep.mubr.f32.mxu0 0.0
    %160 = vmatmul.mubr.f32.gmra.mrb[0].mxu0 %v74
    %v161 = vpop.f32.mrb[0].mxu0
    %v162 = vadd.f32 %v61, %v161
    %v163 = vpop.f32.mrb[0].mxu0
    %164 = vdwg.mxu0
    %v165 = vtanh.pop %v147
    %v166 = vtanh.pop %v152
    %v167 = vtanh.pop %v157
    %v168 = vtanh.pop %v162
    %v169 = vld [vmem:[%s4] sm:$0xff]
    %v170 = vld [vmem:[%s4 + $0x8] sm:$0xff]
    %v171 = vld [vmem:[%s4 + $0x10] sm:$0xff]
    %v172 = vld [vmem:[%s4 + $0x18] sm:$0xff]
    %174 = vset.pattern.permute.xlu0 0
    %175 = vperm.xlu0 %174, %v169
    %v176 = vpop.permute.xlu0 %175
    %179 = vset.pattern.permute.xlu0 0
    %180 = vperm.xlu0 %179, %v170
    %v181 = vpop.permute.xlu0 %180
    %184 = vset.pattern.permute.xlu0 0
    %185 = vperm.xlu0 %184, %v171
    %v186 = vpop.permute.xlu0 %185
    %189 = vset.pattern.permute.xlu0 0
    %190 = vperm.xlu0 %189, %v172
    %v191 = vpop.permute.xlu0 %190
    %vm193 = vcmask 261120
    %v195 = vsel %vm193, %v34, 0
    %v198 = vsel %vm193, %v35, 0
    %v201 = vsel %vm193, %v36, 0
    %v204 = vsel %vm193, %v37, 0
    %206 = vmatprep.subr.mxu0 0.0
    %207 = vmatpush1.msra.mxu0 %v165
    %208 = vmatprep.subr.mxu0 0.0
    %209 = vmatpush1.msra.mxu0 %v166
    %210 = vmatprep.subr.mxu0 0.0
    %211 = vmatpush1.msra.mxu0 %v167
    %212 = vmatprep.subr.mxu0 0.0
    %213 = vmatpush1.msra.mxu0 %v168
    %214 = vmatprep.subr.mxu0 0.0
    %215 = vmatpush1.msra.mxu0 0.0
    %216 = vmatprep.subr.mxu0 0.0
    %217 = vmatpush1.msra.mxu0 0.0
    %218 = vmatprep.subr.mxu0 0.0
    %219 = vmatpush1.msra.mxu0 0.0
    %220 = vmatprep.subr.mxu0 0.0
    %221 = vmatpush1.msra.mxu0 0.0
    %222 = vmatprep.subr.mxu0 0.0
    %223 = vmatpush1.msra.mxu0 0.0
    %224 = vmatprep.subr.mxu0 0.0
    %225 = vmatpush1.msra.mxu0 0.0
    %226 = vmatprep.subr.mxu0 0.0
    %227 = vmatpush1.msra.mxu0 0.0
    %228 = vmatprep.subr.mxu0 0.0
    %229 = vmatpush1.msra.mxu0 0.0
    %230 = vmatprep.subr.mxu0 0.0
    %231 = vmatpush1.msra.mxu0 0.0
    %232 = vmatprep.subr.mxu0 0.0
    %233 = vmatpush1.msra.mxu0 0.0
    %234 = vmatprep.subr.mxu0 0.0
    %235 = vmatpush1.msra.mxu0 0.0
    %236 = vmatprep.subr.mxu0 0.0
    %237 = vmatpush1.msra.mxu0 0.0
    %238 = vmatprep.subr.mxu0 0.0
    %239 = vmatpush1.msra.mxu0 0.0
    %240 = vmatprep.subr.mxu0 0.0
    %241 = vmatpush1.msra.mxu0 0.0
    %242 = vmatprep.subr.mxu0 0.0
    %243 = vmatpush1.msra.mxu0 0.0
    %244 = vmatprep.subr.mxu0 0.0
    %245 = vmatpush1.msra.mxu0 0.0
    %246 = vmatprep.subr.mxu0 0.0
    %247 = vmatpush1.msra.mxu0 0.0
    %248 = vmatprep.subr.mxu0 0.0
    %249 = vmatpush1.msra.mxu0 0.0
    %250 = vmatprep.subr.mxu0 0.0
    %251 = vmatpush1.msra.mxu0 0.0
    %252 = vmatprep.subr.mxu0 0.0
    %253 = vmatpush1.msra.mxu0 0.0
    %254 = vmatprep.subr.mxu0 0.0
    %255 = vmatpush1.msra.mxu0 0.0
    %256 = vmatprep.subr.mxu0 0.0
    %257 = vmatpush1.msra.mxu0 0.0
    %258 = vmatprep.subr.mxu0 0.0
    %259 = vmatpush1.msra.mxu0 0.0
    %260 = vmatprep.subr.mxu0 0.0
    %261 = vmatpush1.msra.mxu0 0.0
    %262 = vmatprep.subr.mxu0 0.0
    %263 = vmatpush1.msra.mxu0 0.0
    %264 = vmatprep.subr.mxu0 0.0
    %265 = vmatpush1.msra.mxu0 0.0
    %266 = vmatprep.subr.mxu0 0.0
    %267 = vmatpush1.msra.mxu0 0.0
    %268 = vmatprep.subr.mxu0 0.0
    %269 = vmatpush1.msra.mxu0 0.0
    %270 = vmatprep.mubr.f32.mxu0 0.0
    %271 = vmatmul.mubr.f32.gmra.mrb[0].mxu0 %v195
    %v272 = vpop.f32.mrb[0].mxu0
    %v273 = vadd.f32 %v176, %v272
    %v274 = vpop.f32.mrb[0].mxu0
    %275 = vmatprep.mubr.f32.mxu0 0.0
    %276 = vmatmul.mubr.f32.gmra.mrb[0].mxu0 %v198
    %v277 = vpop.f32.mrb[0].mxu0
    %v278 = vadd.f32 %v181, %v277
    %v279 = vpop.f32.mrb[0].mxu0
    %280 = vmatprep.mubr.f32.mxu0 0.0
    %281 = vmatmul.mubr.f32.gmra.mrb[0].mxu0 %v201
    %v282 = vpop.f32.mrb[0].mxu0
    %v283 = vadd.f32 %v186, %v282
    %v284 = vpop.f32.mrb[0].mxu0
    %285 = vmatprep.mubr.f32.mxu0 0.0
    %286 = vmatmul.mubr.f32.gmra.mrb[0].mxu0 %v204
    %v287 = vpop.f32.mrb[0].mxu0
    %v288 = vadd.f32 %v191, %v287
    %v289 = vpop.f32.mrb[0].mxu0
    %290 = vdwg.mxu0
    %v291 = vtanh.pop %v273
    %v292 = vtanh.pop %v278
    %v293 = vtanh.pop %v283
    %v294 = vtanh.pop %v288
    %v295 = vld [vmem:[#allocation2] sm:$0x1]
    %297 = vset.pattern.permute.xlu0 0
    %298 = vperm.xlu0 %297, %v295
    %v299 = vpop.permute.xlu0 %298
    %v301 = vlaneseq
    %v302 = vshrl.u32 %v301, 7
    %v303 = vsub.s32 0, %v302
    %v304 = vrot.slane %v299, %v303
    %v306 = vsel %vm193, %v38, 0
    %308 = vmatprep.subr.mxu0 0.0
    %309 = vmatpush1.msra.mxu0 %v291
    %310 = vmatprep.subr.mxu0 0.0
    %311 = vmatpush1.msra.mxu0 %v292
    %312 = vmatprep.subr.mxu0 0.0
    %313 = vmatpush1.msra.mxu0 %v293
    %314 = vmatprep.subr.mxu0 0.0
    %315 = vmatpush1.msra.mxu0 %v294
    %316 = vmatprep.subr.mxu0 0.0
    %317 = vmatpush1.msra.mxu0 0.0
    %318 = vmatprep.subr.mxu0 0.0
    %319 = vmatpush1.msra.mxu0 0.0
    %320 = vmatprep.subr.mxu0 0.0
    %321 = vmatpush1.msra.mxu0 0.0
    %322 = vmatprep.subr.mxu0 0.0
    %323 = vmatpush1.msra.mxu0 0.0
    %324 = vmatprep.subr.mxu0 0.0
    %325 = vmatpush1.msra.mxu0 0.0
    %326 = vmatprep.subr.mxu0 0.0
    %327 = vmatpush1.msra.mxu0 0.0
    %328 = vmatprep.subr.mxu0 0.0
    %329 = vmatpush1.msra.mxu0 0.0
    %330 = vmatprep.subr.mxu0 0.0
    %331 = vmatpush1.msra.mxu0 0.0
    %332 = vmatprep.subr.mxu0 0.0
    %333 = vmatpush1.msra.mxu0 0.0
    %334 = vmatprep.subr.mxu0 0.0
    %335 = vmatpush1.msra.mxu0 0.0
    %336 = vmatprep.subr.mxu0 0.0
    %337 = vmatpush1.msra.mxu0 0.0
    %338 = vmatprep.subr.mxu0 0.0
    %339 = vmatpush1.msra.mxu0 0.0
    %340 = vmatprep.subr.mxu0 0.0
    %341 = vmatpush1.msra.mxu0 0.0
    %342 = vmatprep.subr.mxu0 0.0
    %343 = vmatpush1.msra.mxu0 0.0
    %344 = vmatprep.subr.mxu0 0.0
    %345 = vmatpush1.msra.mxu0 0.0
    %346 = vmatprep.subr.mxu0 0.0
    %347 = vmatpush1.msra.mxu0 0.0
    %348 = vmatprep.subr.mxu0 0.0
    %349 = vmatpush1.msra.mxu0 0.0
    %350 = vmatprep.subr.mxu0 0.0
    %351 = vmatpush1.msra.mxu0 0.0
    %352 = vmatprep.subr.mxu0 0.0
    %353 = vmatpush1.msra.mxu0 0.0
    %354 = vmatprep.subr.mxu0 0.0
    %355 = vmatpush1.msra.mxu0 0.0
    %356 = vmatprep.subr.mxu0 0.0
    %357 = vmatpush1.msra.mxu0 0.0
    %358 = vmatprep.subr.mxu0 0.0
    %359 = vmatpush1.msra.mxu0 0.0
    %360 = vmatprep.subr.mxu0 0.0
    %361 = vmatpush1.msra.mxu0 0.0
    %362 = vmatprep.subr.mxu0 0.0
    %363 = vmatpush1.msra.mxu0 0.0
    %364 = vmatprep.subr.mxu0 0.0
    %365 = vmatpush1.msra.mxu0 0.0
    %366 = vmatprep.subr.mxu0 0.0
    %367 = vmatpush1.msra.mxu0 0.0
    %368 = vmatprep.subr.mxu0 0.0
    %369 = vmatpush1.msra.mxu0 0.0
    %370 = vmatprep.subr.mxu0 0.0
    %371 = vmatpush1.msra.mxu0 0.0
    %372 = vmatprep.mubr.f32.mxu0 0.0
    %373 = vmatmul.mubr.f32.gmra.mrb[0].mxu0 %v306
    %v374 = vpop.f32.mrb[0].mxu0
    %v375 = vadd.f32 %v304, %v374
    %v376 = vpop.f32.mrb[0].mxu0
    %377 = vdwg.mxu0
    %v378 = vmul.f32 %v375, 0.5
    %v379 = vtanh.pop %v378
    %v380 = vmul.f32 %v379, 0.5
    %v381 = vadd.f32 %v380, 0.5
    %382 = vst [vmem:[#allocation3] sm:$0x1] %v381
    // Predicated region
    $region30: #{tpu_custom_call.1} parent=1 // pred_check
      _
    $region31: #{tpu_custom_call.1} parent=1 // pred_check_branch
      %384 = sbr.rel (0) target = $region33
    $region32: #{tpu_custom_call.1} parent=1 // pred_region
      %s386 = ssub.s32 16, 16
      %387 = vsyncadd [#allocation4], %s386
      %s389 = sshll.u32 [#allocation3], 4
      %s390 = int_to_ptr.vmem [resolvable:$true] %s389
      %392 = dma.vmem_to_hbm [thread:$0]  %s390, 16, %s7, [#allocation4]
    $region33: #{tpu_custom_call.1} parent=1 // pred_fallthru
      _
    // Predicated region
    $region34: #{tpu_custom_call.1} parent=1 // pred_check
      _
    $region35: #{tpu_custom_call.1} parent=1 // pred_check_branch
      %394 = sbr.rel (0) target = $region37
    $region36: #{tpu_custom_call.1} parent=1 // pred_region
      %395 = dma.done [#allocation4], 16
    $region37: #{tpu_custom_call.1} parent=1 // pred_fallthru
      _
    %396 = vsyncpa [#allocation4], 1

</llo_original>
